<compile_context>
chip_gen: v7x
topology: tpu7x:2x2x1
jax: 0.10.0
libtpu: 0.0.40
codegen_flags: <defaults>
</compile_context>

<pallas_src>
import functools

import jax
import jax.numpy as jnp
import numpy as np
from jax import lax
from jax.experimental import pallas as pl
from jax.experimental.pallas import tpu as pltpu

NQ = 4  # 2x2 max-pool quadrants


def _round_up(x, m):
    return (x + m - 1) // m * m


def _conv_relu_pool_kernel(p_ref, w_ref, o_ref, *, nq, co, g):
    # p_ref: (K4+1, tm)      quadrant patches + ones row, lanes = pooled positions
    # w_ref: (g*nq*co, K4+1) all branches' block-diagonal conv weights + bias column
    # o_ref: (g*co, tm)      lane-dense output tile
    y = jnp.dot(w_ref[...], p_ref[...], preferred_element_type=jnp.float32)  # (g*nq*co, tm)
    outs = []
    for b in range(g):                       # per-branch 2x2 max-pool over quadrant rows
        base = b * nq * co
        r = y[base:base + co]
        for q in range(1, nq):
            r = jnp.maximum(r, y[base + q * co:base + (q + 1) * co])
        outs.append(r)
    pooled = outs[0] if g == 1 else jnp.concatenate(outs, axis=0)            # (g*co, tm)
    o_ref[...] = jnp.maximum(pooled, 0.0).astype(o_ref.dtype)                # ReLU after max (exact)


def _im2col_quadrants(x, fh, fw, sh, sw):
    """Return (NQ*K, M) patches built directly in K-leading (lane-dense M) layout."""
    B, Cin, H, W = x.shape
    Ho = (H - fh) // sh + 1
    Wo = (W - fw) // sw + 1
    Hp, Wp = Ho // 2, Wo // 2
    K = fh * fw * Cin
    M = B * Hp * Wp
    rows = (jnp.arange(Ho) * sh)[:, None] + jnp.arange(fh)[None, :]   # (Ho, fh)
    cols = (jnp.arange(Wo) * sw)[:, None] + jnp.arange(fw)[None, :]   # (Wo, fw)
    p = x[:, :, rows]                                                 # (B, Cin, Ho, fh, W)
    p = p[..., cols]                                                  # (B, Cin, Ho, fh, Wo, fw)
    p = jnp.transpose(p, (3, 5, 1, 0, 2, 4))                          # (fh, fw, Cin, B, Ho, Wo)
    p = p.reshape(K, B, Ho, Wo)                                       # K order = (fh, fw, Cin)
    quads = [p[:, :, dh:2 * Hp:2, dw:2 * Wp:2].reshape(K, M)          # floor-mode pooling
             for dh in range(2) for dw in range(2)]
    return jnp.concatenate(quads, axis=0)                             # (NQ*K, M), M = (B, Hp, Wp)


def _conv_relu_pool_group(x, ws, bs, stride, compute_dtype, tile_m):
    """G branches sharing one conv geometry: Conv2d(VALID) -> ReLU -> MaxPool2d(2,2)."""
    G, Co, Cin, fh, fw = ws.shape
    B, _, H, W = x.shape
    sh, sw = stride
    Ho = (H - fh) // sh + 1
    Wo = (W - fw) // sw + 1
    Hp, Wp = Ho // 2, Wo // 2
    K = fh * fw * Cin
    K4 = NQ * K
    K4p = K4 + 1                      # + ones row: bias folded into the matmul
    M = B * Hp * Wp

    # ---- JAX glue: lane-dense patch tensor (shared by all G branches of this group) ----
    Mpad = _round_up(M, 128)
    p4 = _im2col_quadrants(x, fh, fw, sh, sw)                                 # (K4, M)
    p4 = jnp.concatenate([p4, jnp.ones((1, M), p4.dtype)], axis=0)            # (K4+1, M)
    p4 = jnp.pad(p4, ((0, 0), (0, Mpad - M))).astype(compute_dtype)           # (K4+1, Mpad)

    # Block-diagonal weights for the 4 pool quadrants, all G branches stacked vertically,
    # plus a bias column per quadrant block (max_q(conv_q + b) == max_q(conv_q) + b).
    w_mat = jnp.transpose(ws, (0, 1, 3, 4, 2)).reshape(G, Co, K)              # (G, Co, K)
    eye = jnp.eye(NQ, dtype=w_mat.dtype)
    w_bd = jnp.einsum("ij,gck->gicjk", eye, w_mat).reshape(G, NQ * Co, K4)
    b_col = jnp.tile(bs.astype(w_mat.dtype)[:, None, :], (1, NQ, 1)).reshape(G, NQ * Co, 1)
    w_full = jnp.concatenate([w_bd, b_col], axis=2).reshape(G * NQ * Co, K4p)
    w_full = w_full.astype(compute_dtype)

    # ---- Tile over M only; keep double-buffered working set v7x-safe; >=2 tiles if possible ----
    in_bytes = K4p * jnp.dtype(compute_dtype).itemsize     # patch bytes per pooled column
    out_bytes = G * Co * jnp.dtype(x.dtype).itemsize       # output bytes per pooled column
    vmem_budget = 32 << 20                                 # double-buffered working-set budget
    tm_cap = max(vmem_budget // (2 * (in_bytes + out_bytes)), 128)
    tm = min(max(tile_m, 128), Mpad, tm_cap)
    tm = (tm // 128) * 128
    while Mpad % tm:                                       # keep tm a 128-multiple dividing Mpad
        tm -= 128
    if Mpad // tm < 2 and Mpad >= 256:                     # feed both v7x TensorCores
        tm = ((Mpad // 2) // 128) * 128
        while Mpad % tm:
            tm -= 128
    num_m = Mpad // tm

    kernel = functools.partial(_conv_relu_pool_kernel, nq=NQ, co=Co, g=G)
    out = pl.pallas_call(
        kernel,
        out_shape=jax.ShapeDtypeStruct((G * Co, Mpad), x.dtype),
        grid=(num_m,),
        in_specs=[
            pl.BlockSpec((K4p, tm), lambda i: (0, i)),           # shared patch tile (dominant stream)
            pl.BlockSpec((G * NQ * Co, K4p), lambda i: (0, 0)),  # resident weights (+bias column)
        ],
        out_specs=pl.BlockSpec((G * Co, tm), lambda i: (0, i)),  # lane-dense writeback
        compiler_params=pltpu.CompilerParams(
            dimension_semantics=("parallel",),
            vmem_limit_bytes=48 << 20),
    )(p4, w_full)

    out = out[:, :M].reshape(G, Co, B, Hp, Wp)
    return jnp.transpose(out, (0, 2, 1, 3, 4))               # (G, B, Co, Hp, Wp)  NCHW per branch


def make_branch_configs(filter_sizes, embedding_dim, strides):
    fd2 = int(embedding_dim / 5)          # filter_dim_2 == stride_dim_2
    return (
        (filter_sizes[0], fd2, strides[0], fd2),
        (filter_sizes[1], fd2, strides[1], fd2),
        (filter_sizes[1], fd2, strides[2], fd2),
        (filter_sizes[1], fd2, strides[3], fd2),
    )


def init_cnn_block2_params(key, branch_cfgs, num_in_channels, num_out_channels):
    params = []
    for i, (kh, kw, _, _) in enumerate(branch_cfgs):
        k_w, k_b = jax.random.split(jax.random.fold_in(key, i))
        w = 0.1 * jax.random.normal(k_w, (num_out_channels, num_in_channels, kh, kw),
                                    dtype=jnp.float32)
        b = 0.1 * jax.random.normal(k_b, (num_out_channels,), dtype=jnp.float32)
        params.append({"w": w, "b": b})
    return params


def cnn_block2_forward(params, x, *, branch_cfgs, compute_dtype=jnp.float32, tile_m=4096):
    """Matches CNNBlock2.forward: returns the 4 branch outputs (NCHW) as a tuple.

    Branches with identical conv geometry are grouped into ONE pallas_call sharing a
    single im2col patch tensor; their weights are folded into one stacked matmul.
    Note: compute_dtype=jnp.bfloat16 halves the dominant HBM stream (all TPU gens,
    v5e benefits most) at reduced conv precision.
    """
    groups = {}
    for idx, cfg in enumerate(branch_cfgs):
        groups.setdefault(cfg, []).append(idx)
    outs = [None] * len(branch_cfgs)
    for (kh, kw, sh, sw), idxs in groups.items():
        ws = jnp.stack([params[i]["w"] for i in idxs])     # (G, Co, Cin, kh, kw)
        bs = jnp.stack([params[i]["b"] for i in idxs])     # (G, Co)
        group_out = _conv_relu_pool_group(x, ws, bs, (sh, sw), compute_dtype, tile_m)
        for g, i in enumerate(idxs):
            outs[i] = group_out[g]
    return tuple(outs)


# Pure-JAX reference (mirrors PyTorch Conv2d/ReLU/MaxPool2d semantics) for validation.
def _branch_ref(x, w, b, stride):
    y = lax.conv_general_dilated(x, w, window_strides=stride, padding="VALID",
                                 dimension_numbers=("NCHW", "OIHW", "NCHW"),
                                 precision=lax.Precision.HIGHEST)
    y = jnp.maximum(y + b[None, :, None, None], 0.0)
    y = lax.reduce_window(y, -jnp.inf, lax.max, (1, 1, 2, 2), (1, 1, 2, 2), "VALID")
    return y


if __name__ == "__main__":
    # Module hyperparameters (small but consistent with the forward pass).
    filter_sizes = [3, 4]
    embedding_dim = 20          # -> filter_dim_2 = stride_dim_2 = 4
    strides = [1, 1, 2, 2]
    num_in_channels = 2
    num_out_channels = 8
    B, H = 2, 16                # H = sequence length, W = embedding_dim

    key = jax.random.PRNGKey(0)
    kx, kp = jax.random.split(key)
    x = jax.random.normal(kx, (B, num_in_channels, H, embedding_dim), dtype=jnp.float32)

    branch_cfgs = make_branch_configs(filter_sizes, embedding_dim, strides)
    params = init_cnn_block2_params(kp, branch_cfgs, num_in_channels, num_out_channels)

    # f32 path (validated tightly).
    fwd = jax.jit(functools.partial(cnn_block2_forward, branch_cfgs=branch_cfgs,
                                    compute_dtype=jnp.float32))
    outs = jax.block_until_ready(fwd(params, x))

    refs = tuple(_branch_ref(x, params[i]["w"], params[i]["b"], (cfg[2], cfg[3]))
                 for i, cfg in enumerate(branch_cfgs))
    for o, r in zip(outs, refs):
        assert o.shape == r.shape, (o.shape, r.shape)
        np.testing.assert_allclose(np.asarray(o), np.asarray(r), rtol=1e-3, atol=1e-4)

    # bf16 DMA/MXU path (max/ReLU epilogue + output stay f32); looser tolerance.
    fwd_bf16 = jax.jit(functools.partial(cnn_block2_forward, branch_cfgs=branch_cfgs,
                                         compute_dtype=jnp.bfloat16))
    outs_bf16 = jax.block_until_ready(fwd_bf16(params, x))
    for o, r in zip(outs_bf16, refs):
        np.testing.assert_allclose(np.asarray(o), np.asarray(r), rtol=5e-2, atol=5e-2)

    print("KERNEL_OK")
</pallas_src>

<mosaic_0001>
module attributes {stable_mosaic.version = 11 : i64} {
  func.func @_conv_relu_pool_kernel(%arg0: i32, %arg1: memref<129x128xf32, #tpu.memory_space<vmem>>, %arg2: memref<64x129xf32, #tpu.memory_space<vmem>>, %arg3: memref<16x128xf32, #tpu.memory_space<vmem>>) attributes {dimension_semantics = [#tpu.dimension_semantics<parallel>], iteration_bounds = array<i64: 1>, scalar_prefetch = 0 : i64, scratch_operands = 0 : i64, tpu.core_type = #tpu.core_type<tc>, window_params = [{transform_indices = @transform_0, window_bounds = array<i64: 129, 128>}, {pipeline_mode = #tpu.pipeline_mode<synchronous>, transform_indices = @transform_1, window_bounds = array<i64: 64, 129>}, {transform_indices = @transform_2, window_bounds = array<i64: 16, 128>}]} {
    %c0 = arith.constant 0 : index
    %c0_0 = arith.constant 0 : index
    %0 = vector.load %arg2[%c0, %c0_0] : memref<64x129xf32, #tpu.memory_space<vmem>>, vector<64x129xf32>
    %c0_1 = arith.constant 0 : index
    %c0_2 = arith.constant 0 : index
    %1 = vector.load %arg1[%c0_1, %c0_2] : memref<129x128xf32, #tpu.memory_space<vmem>>, vector<129x128xf32>
    %cst = arith.constant dense<0.000000e+00> : vector<64x128xf32>
    %2 = tpu.matmul %0, %1, %cst {dimension_numbers = #tpu.dot_dimension_numbers<[1], [0], [0], [1], [0, 0, 1, 1], [], []>} : vector<64x129xf32>, vector<129x128xf32>, vector<64x128xf32> -> vector<64x128xf32>
    %3 = vector.extract_strided_slice %2 {offsets = [0, 0], sizes = [8, 128], strides = [1, 1]} : vector<64x128xf32> to vector<8x128xf32>
    %4 = vector.extract_strided_slice %2 {offsets = [8, 0], sizes = [8, 128], strides = [1, 1]} : vector<64x128xf32> to vector<8x128xf32>
    %5 = arith.maximumf %3, %4 : vector<8x128xf32>
    %6 = vector.extract_strided_slice %2 {offsets = [16, 0], sizes = [8, 128], strides = [1, 1]} : vector<64x128xf32> to vector<8x128xf32>
    %7 = arith.maximumf %5, %6 : vector<8x128xf32>
    %8 = vector.extract_strided_slice %2 {offsets = [24, 0], sizes = [8, 128], strides = [1, 1]} : vector<64x128xf32> to vector<8x128xf32>
    %9 = arith.maximumf %7, %8 : vector<8x128xf32>
    %10 = vector.extract_strided_slice %2 {offsets = [32, 0], sizes = [8, 128], strides = [1, 1]} : vector<64x128xf32> to vector<8x128xf32>
    %11 = vector.extract_strided_slice %2 {offsets = [40, 0], sizes = [8, 128], strides = [1, 1]} : vector<64x128xf32> to vector<8x128xf32>
    %12 = arith.maximumf %10, %11 : vector<8x128xf32>
    %13 = vector.extract_strided_slice %2 {offsets = [48, 0], sizes = [8, 128], strides = [1, 1]} : vector<64x128xf32> to vector<8x128xf32>
    %14 = arith.maximumf %12, %13 : vector<8x128xf32>
    %15 = vector.extract_strided_slice %2 {offsets = [56, 0], sizes = [8, 128], strides = [1, 1]} : vector<64x128xf32> to vector<8x128xf32>
    %16 = arith.maximumf %14, %15 : vector<8x128xf32>
    %17 = tpu.concatenate %9, %16 in 0 : vector<8x128xf32>, vector<8x128xf32> -> vector<16x128xf32>
    %cst_3 = arith.constant 0.000000e+00 : f32
    %18 = vector.broadcast %cst_3 : f32 to vector<16x128xf32>
    %19 = arith.maximumf %17, %18 : vector<16x128xf32>
    %c0_4 = arith.constant 0 : index
    %c0_5 = arith.constant 0 : index
    %20 = vector.load %arg3[%c0_4, %c0_5] : memref<16x128xf32, #tpu.memory_space<vmem>>, vector<16x128xf32>
    tpu.vector_store %arg3[%c0_4, %c0_5], %19 {strides = array<i32>} : memref<16x128xf32, #tpu.memory_space<vmem>>, vector<16x128xf32>,
    return
  }
  func.func @transform_0(%arg0: i32) -> (i32, i32) {
    %c0_i32 = arith.constant 0 : i32
    %c0_i32_0 = arith.constant 0 : i32
    return %c0_i32, %arg0 : i32, i32
  }
  func.func @transform_1(%arg0: i32) -> (i32, i32) {
    %c0_i32 = arith.constant 0 : i32
    %c0_i32_0 = arith.constant 0 : i32
    %c0_i32_1 = arith.constant 0 : i32
    return %c0_i32, %c0_i32_0 : i32, i32
  }
  func.func @transform_2(%arg0: i32) -> (i32, i32) {
    %c0_i32 = arith.constant 0 : i32
    %c0_i32_0 = arith.constant 0 : i32
    return %c0_i32, %arg0 : i32, i32
  }
}

module attributes {stable_mosaic.version = 11 : i64} {
  func.func @_conv_relu_pool_kernel(%arg0: i32, %arg1: memref<129x128xf32, #tpu.memory_space<vmem>>, %arg2: memref<32x129xf32, #tpu.memory_space<vmem>>, %arg3: memref<8x128xf32, #tpu.memory_space<vmem>>) attributes {dimension_semantics = [#tpu.dimension_semantics<parallel>], iteration_bounds = array<i64: 1>, scalar_prefetch = 0 : i64, scratch_operands = 0 : i64, tpu.core_type = #tpu.core_type<tc>, window_params = [{transform_indices = @transform_0, window_bounds = array<i64: 129, 128>}, {pipeline_mode = #tpu.pipeline_mode<synchronous>, transform_indices = @transform_1, window_bounds = array<i64: 32, 129>}, {transform_indices = @transform_2, window_bounds = array<i64: 8, 128>}]} {
    %c0 = arith.constant 0 : index
    %c0_0 = arith.constant 0 : index
    %0 = vector.load %arg2[%c0, %c0_0] : memref<32x129xf32, #tpu.memory_space<vmem>>, vector<32x129xf32>
    %c0_1 = arith.constant 0 : index
    %c0_2 = arith.constant 0 : index
    %1 = vector.load %arg1[%c0_1, %c0_2] : memref<129x128xf32, #tpu.memory_space<vmem>>, vector<129x128xf32>
    %cst = arith.constant dense<0.000000e+00> : vector<32x128xf32>
    %2 = tpu.matmul %0, %1, %cst {dimension_numbers = #tpu.dot_dimension_numbers<[1], [0], [0], [1], [0, 0, 1, 1], [], []>} : vector<32x129xf32>, vector<129x128xf32>, vector<32x128xf32> -> vector<32x128xf32>
    %3 = vector.extract_strided_slice %2 {offsets = [0, 0], sizes = [8, 128], strides = [1, 1]} : vector<32x128xf32> to vector<8x128xf32>
    %4 = vector.extract_strided_slice %2 {offsets = [8, 0], sizes = [8, 128], strides = [1, 1]} : vector<32x128xf32> to vector<8x128xf32>
    %5 = arith.maximumf %3, %4 : vector<8x128xf32>
    %6 = vector.extract_strided_slice %2 {offsets = [16, 0], sizes = [8, 128], strides = [1, 1]} : vector<32x128xf32> to vector<8x128xf32>
    %7 = arith.maximumf %5, %6 : vector<8x128xf32>
    %8 = vector.extract_strided_slice %2 {offsets = [24, 0], sizes = [8, 128], strides = [1, 1]} : vector<32x128xf32> to vector<8x128xf32>
    %9 = arith.maximumf %7, %8 : vector<8x128xf32>
    %cst_3 = arith.constant 0.000000e+00 : f32
    %10 = vector.broadcast %cst_3 : f32 to vector<8x128xf32>
    %11 = arith.maximumf %9, %10 : vector<8x128xf32>
    %c0_4 = arith.constant 0 : index
    %c0_5 = arith.constant 0 : index
    %12 = vector.load %arg3[%c0_4, %c0_5] : memref<8x128xf32, #tpu.memory_space<vmem>>, vector<8x128xf32>
    tpu.vector_store %arg3[%c0_4, %c0_5], %11 {strides = array<i32>} : memref<8x128xf32, #tpu.memory_space<vmem>>, vector<8x128xf32>,
    return
  }
  func.func @transform_0(%arg0: i32) -> (i32, i32) {
    %c0_i32 = arith.constant 0 : i32
    %c0_i32_0 = arith.constant 0 : i32
    return %c0_i32, %arg0 : i32, i32
  }
  func.func @transform_1(%arg0: i32) -> (i32, i32) {
    %c0_i32 = arith.constant 0 : i32
    %c0_i32_0 = arith.constant 0 : i32
    %c0_i32_1 = arith.constant 0 : i32
    return %c0_i32, %c0_i32_0 : i32, i32
  }
  func.func @transform_2(%arg0: i32) -> (i32, i32) {
    %c0_i32 = arith.constant 0 : i32
    %c0_i32_0 = arith.constant 0 : i32
    return %c0_i32, %arg0 : i32, i32
  }
}

module attributes {stable_mosaic.version = 11 : i64} {
  func.func @_conv_relu_pool_kernel(%arg0: i32, %arg1: memref<97x128xf32, #tpu.memory_space<vmem>>, %arg2: memref<32x97xf32, #tpu.memory_space<vmem>>, %arg3: memref<8x128xf32, #tpu.memory_space<vmem>>) attributes {dimension_semantics = [#tpu.dimension_semantics<parallel>], iteration_bounds = array<i64: 1>, scalar_prefetch = 0 : i64, scratch_operands = 0 : i64, tpu.core_type = #tpu.core_type<tc>, window_params = [{transform_indices = @transform_0, window_bounds = array<i64: 97, 128>}, {pipeline_mode = #tpu.pipeline_mode<synchronous>, transform_indices = @transform_1, window_bounds = array<i64: 32, 97>}, {transform_indices = @transform_2, window_bounds = array<i64: 8, 128>}]} {
    %c0 = arith.constant 0 : index
    %c0_0 = arith.constant 0 : index
    %0 = vector.load %arg2[%c0, %c0_0] : memref<32x97xf32, #tpu.memory_space<vmem>>, vector<32x97xf32>
    %c0_1 = arith.constant 0 : index
    %c0_2 = arith.constant 0 : index
    %1 = vector.load %arg1[%c0_1, %c0_2] : memref<97x128xf32, #tpu.memory_space<vmem>>, vector<97x128xf32>
    %cst = arith.constant dense<0.000000e+00> : vector<32x128xf32>
    %2 = tpu.matmul %0, %1, %cst {dimension_numbers = #tpu.dot_dimension_numbers<[1], [0], [0], [1], [0, 0, 1, 1], [], []>} : vector<32x97xf32>, vector<97x128xf32>, vector<32x128xf32> -> vector<32x128xf32>
    %3 = vector.extract_strided_slice %2 {offsets = [0, 0], sizes = [8, 128], strides = [1, 1]} : vector<32x128xf32> to vector<8x128xf32>
    %4 = vector.extract_strided_slice %2 {offsets = [8, 0], sizes = [8, 128], strides = [1, 1]} : vector<32x128xf32> to vector<8x128xf32>
    %5 = arith.maximumf %3, %4 : vector<8x128xf32>
    %6 = vector.extract_strided_slice %2 {offsets = [16, 0], sizes = [8, 128], strides = [1, 1]} : vector<32x128xf32> to vector<8x128xf32>
    %7 = arith.maximumf %5, %6 : vector<8x128xf32>
    %8 = vector.extract_strided_slice %2 {offsets = [24, 0], sizes = [8, 128], strides = [1, 1]} : vector<32x128xf32> to vector<8x128xf32>
    %9 = arith.maximumf %7, %8 : vector<8x128xf32>
    %cst_3 = arith.constant 0.000000e+00 : f32
    %10 = vector.broadcast %cst_3 : f32 to vector<8x128xf32>
    %11 = arith.maximumf %9, %10 : vector<8x128xf32>
    %c0_4 = arith.constant 0 : index
    %c0_5 = arith.constant 0 : index
    %12 = vector.load %arg3[%c0_4, %c0_5] : memref<8x128xf32, #tpu.memory_space<vmem>>, vector<8x128xf32>
    tpu.vector_store %arg3[%c0_4, %c0_5], %11 {strides = array<i32>} : memref<8x128xf32, #tpu.memory_space<vmem>>, vector<8x128xf32>,
    return
  }
  func.func @transform_0(%arg0: i32) -> (i32, i32) {
    %c0_i32 = arith.constant 0 : i32
    %c0_i32_0 = arith.constant 0 : i32
    return %c0_i32, %arg0 : i32, i32
  }
  func.func @transform_1(%arg0: i32) -> (i32, i32) {
    %c0_i32 = arith.constant 0 : i32
    %c0_i32_0 = arith.constant 0 : i32
    %c0_i32_1 = arith.constant 0 : i32
    return %c0_i32, %c0_i32_0 : i32, i32
  }
  func.func @transform_2(%arg0: i32) -> (i32, i32) {
    %c0_i32 = arith.constant 0 : i32
    %c0_i32_0 = arith.constant 0 : i32
    return %c0_i32, %arg0 : i32, i32
  }
}

</mosaic_0001>

<llo_original>
// kernel: cnn_block2_forward.5
$region0: #{cnn_block2_forward.5}
  #allocation0 [shape = 'u32[]', space=smem, size = 0x4, offset = 0x4, fixed_abs, tag = 'smem constant byte address 0x4 - core index']
  #allocation1 [shape = 'u32[144,128]{1,0:T(1,128)}', space=vmem, size = 0x12000, scoped, tag = 'internal scratch']
  %s0 = inlined_call_operand.vmem [shape: f32[129,128], index: 0, kind: input, shape index: {}]
  %s1 = inlined_call_operand.vmem [shape: f32[64,129], index: 1, kind: input, shape index: {}]
  %s2 = inlined_call_operand.vmem [shape: f32[16,128], index: 2, kind: output, shape index: {}]
  %s3 = sld [smem:[#allocation0]]
  $region18: #{cnn_block2_forward.5} parent=0
    _
  %s5 = ssub.s32 1, %s3
  %s6 = scalar_select 0, %s5, %s3
  // Predicated region
  $region2: #{cnn_block2_forward.5} parent=0 // pred_check
    _
  $region3: #{cnn_block2_forward.5} parent=0 // pred_check_branch
    %8 = sbr.rel (0) target = $region5
  $region4: #{cnn_block2_forward.5} parent=0 // pred_region
    _
  $region5: #{cnn_block2_forward.5} parent=0 // pred_fallthru
    _
  // Predicated region
  $region6: #{cnn_block2_forward.5} parent=0 // pred_check
    _
  $region7: #{cnn_block2_forward.5} parent=0 // pred_check_branch
    %10 = sbr.rel (0) target = $region9
  $region8: #{cnn_block2_forward.5} parent=0 // pred_region
    _
  $region9: #{cnn_block2_forward.5} parent=0 // pred_fallthru
    _
  %v11 = vld [vmem:[%s1] sm:$0xff]
  %v12 = vld [vmem:[%s1 + $0x8] sm:$0xff]
  %v13 = vld [vmem:[%s1 + $0x10] sm:$0xff]
  %v14 = vld [vmem:[%s1 + $0x18] sm:$0xff]
  %v15 = vld [vmem:[%s1 + $0x20] sm:$0xff]
  %v16 = vld [vmem:[%s1 + $0x28] sm:$0xff]
  %v17 = vld [vmem:[%s1 + $0x30] sm:$0xff]
  %v18 = vld [vmem:[%s1 + $0x38] sm:$0xff]
  %v19 = vld [vmem:[%s1 + $0x40] sm:$0xff]
  %v20 = vld [vmem:[%s1 + $0x48] sm:$0xff]
  %v21 = vld [vmem:[%s1 + $0x50] sm:$0xff]
  %v22 = vld [vmem:[%s1 + $0x58] sm:$0xff]
  %v23 = vld [vmem:[%s1 + $0x60] sm:$0xff]
  %v24 = vld [vmem:[%s1 + $0x68] sm:$0xff]
  %v25 = vld [vmem:[%s1 + $0x70] sm:$0xff]
  %v26 = vld [vmem:[%s1 + $0x78] sm:$0xff]
  %v27 = vld [vmem:[%s0] sm:$0xff]
  %v28 = vld [vmem:[%s0 + $0x8] sm:$0xff]
  %v29 = vld [vmem:[%s0 + $0x10] sm:$0xff]
  %v30 = vld [vmem:[%s0 + $0x18] sm:$0xff]
  %v31 = vld [vmem:[%s0 + $0x20] sm:$0xff]
  %v32 = vld [vmem:[%s0 + $0x28] sm:$0xff]
  %v33 = vld [vmem:[%s0 + $0x30] sm:$0xff]
  %v34 = vld [vmem:[%s0 + $0x38] sm:$0xff]
  %v35 = vld [vmem:[%s0 + $0x40] sm:$0xff]
  %v36 = vld [vmem:[%s0 + $0x48] sm:$0xff]
  %v37 = vld [vmem:[%s0 + $0x50] sm:$0xff]
  %v38 = vld [vmem:[%s0 + $0x58] sm:$0xff]
  %v39 = vld [vmem:[%s0 + $0x60] sm:$0xff]
  %v40 = vld [vmem:[%s0 + $0x68] sm:$0xff]
  %v41 = vld [vmem:[%s0 + $0x70] sm:$0xff]
  %v42 = vld [vmem:[%s0 + $0x78] sm:$0xff]
  %v43 = vld [vmem:[%s0 + $0x80] sm:$0x1]
  %vm44 = vcmask 7168
  %v46 = vsel %vm44, %v12, 0
  %v49 = vsel %vm44, %v14, 0
  %v52 = vsel %vm44, %v16, 0
  %v55 = vsel %vm44, %v18, 0
  %v58 = vsel %vm44, %v20, 0
  %v61 = vsel %vm44, %v22, 0
  %v64 = vsel %vm44, %v24, 0
  %v67 = vsel %vm44, %v26, 0
  %vm69 = vcmask 1040384
  %v71 = vsel %vm69, %v43, 0
  %73 = vmatprep.subr.mxu0 0.0
  %74 = vmatpush1.msra.mxu0 %v27
  %75 = vmatprep.subr.mxu0 0.0
  %76 = vmatpush1.msra.mxu0 %v28
  %77 = vmatprep.subr.mxu0 0.0
  %78 = vmatpush1.msra.mxu0 %v29
  %79 = vmatprep.subr.mxu0 0.0
  %80 = vmatpush1.msra.mxu0 %v30
  %81 = vmatprep.subr.mxu0 0.0
  %82 = vmatpush1.msra.mxu0 %v31
  %83 = vmatprep.subr.mxu0 0.0
  %84 = vmatpush1.msra.mxu0 %v32
  %85 = vmatprep.subr.mxu0 0.0
  %86 = vmatpush1.msra.mxu0 %v33
  %87 = vmatprep.subr.mxu0 0.0
  %88 = vmatpush1.msra.mxu0 %v34
  %89 = vmatprep.subr.mxu0 0.0
  %90 = vmatpush1.msra.mxu0 %v35
  %91 = vmatprep.subr.mxu0 0.0
  %92 = vmatpush1.msra.mxu0 %v36
  %93 = vmatprep.subr.mxu0 0.0
  %94 = vmatpush1.msra.mxu0 %v37
  %95 = vmatprep.subr.mxu0 0.0
  %96 = vmatpush1.msra.mxu0 %v38
  %97 = vmatprep.subr.mxu0 0.0
  %98 = vmatpush1.msra.mxu0 %v39
  %99 = vmatprep.subr.mxu0 0.0
  %100 = vmatpush1.msra.mxu0 %v40
  %101 = vmatprep.subr.mxu0 0.0
  %102 = vmatpush1.msra.mxu0 %v41
  %103 = vmatprep.subr.mxu0 0.0
  %104 = vmatpush1.msra.mxu0 %v42
  %105 = vmatprep.subr.mxu0 0.0
  %106 = vmatpush1.msra.mxu0 %v71
  %107 = vmatprep.subr.mxu0 0.0
  %108 = vmatpush1.msra.mxu0 0.0
  %109 = vmatprep.subr.mxu0 0.0
  %110 = vmatpush1.msra.mxu0 0.0
  %111 = vmatprep.subr.mxu0 0.0
  %112 = vmatpush1.msra.mxu0 0.0
  %113 = vmatprep.subr.mxu0 0.0
  %114 = vmatpush1.msra.mxu0 0.0
  %115 = vmatprep.subr.mxu0 0.0
  %116 = vmatpush1.msra.mxu0 0.0
  %117 = vmatprep.subr.mxu0 0.0
  %118 = vmatpush1.msra.mxu0 0.0
  %119 = vmatprep.subr.mxu0 0.0
  %120 = vmatpush1.msra.mxu0 0.0
  %121 = vmatprep.subr.mxu0 0.0
  %122 = vmatpush1.msra.mxu0 0.0
  %123 = vmatprep.subr.mxu0 0.0
  %124 = vmatpush1.msra.mxu0 0.0
  %125 = vmatprep.subr.mxu0 0.0
  %126 = vmatpush1.msra.mxu0 0.0
  %127 = vmatprep.subr.mxu0 0.0
  %128 = vmatpush1.msra.mxu0 0.0
  %129 = vmatprep.subr.mxu0 0.0
  %130 = vmatpush1.msra.mxu0 0.0
  %131 = vmatprep.subr.mxu0 0.0
  %132 = vmatpush1.msra.mxu0 0.0
  %133 = vmatprep.subr.mxu0 0.0
  %134 = vmatpush1.msra.mxu0 0.0
  %135 = vmatprep.subr.mxu0 0.0
  %136 = vmatpush1.msra.mxu0 0.0
  %137 = vmatprep.mubr.f32.mxu0 %v46
  %138 = vmatmul.mubr.f32.gmra.mrb[0].mxu0 %v11
  %v139 = vpop.f32.mrb[0].mxu0
  %v140 = vadd.f32 0.0, %v139
  %v141 = vpop.f32.mrb[0].mxu0
  %142 = vmatprep.mubr.f32.mxu0 %v49
  %143 = vmatmul.mubr.f32.gmra.mrb[0].mxu0 %v13
  %v144 = vpop.f32.mrb[0].mxu0
  %v145 = vadd.f32 0.0, %v144
  %v146 = vpop.f32.mrb[0].mxu0
  %147 = vmatprep.mubr.f32.mxu0 %v52
  %148 = vmatmul.mubr.f32.gmra.mrb[0].mxu0 %v15
  %v149 = vpop.f32.mrb[0].mxu0
  %v150 = vadd.f32 0.0, %v149
  %v151 = vpop.f32.mrb[0].mxu0
  %152 = vmatprep.mubr.f32.mxu0 %v55
  %153 = vmatmul.mubr.f32.gmra.mrb[0].mxu0 %v17
  %v154 = vpop.f32.mrb[0].mxu0
  %v155 = vadd.f32 0.0, %v154
  %v156 = vpop.f32.mrb[0].mxu0
  %157 = vmatprep.mubr.f32.mxu0 %v58
  %158 = vmatmul.mubr.f32.gmra.mrb[0].mxu0 %v19
  %v159 = vpop.f32.mrb[0].mxu0
  %v160 = vadd.f32 0.0, %v159
  %v161 = vpop.f32.mrb[0].mxu0
  %162 = vmatprep.mubr.f32.mxu0 %v61
  %163 = vmatmul.mubr.f32.gmra.mrb[0].mxu0 %v21
  %v164 = vpop.f32.mrb[0].mxu0
  %v165 = vadd.f32 0.0, %v164
  %v166 = vpop.f32.mrb[0].mxu0
  %167 = vmatprep.mubr.f32.mxu0 %v64
  %168 = vmatmul.mubr.f32.gmra.mrb[0].mxu0 %v23
  %v169 = vpop.f32.mrb[0].mxu0
  %v170 = vadd.f32 0.0, %v169
  %v171 = vpop.f32.mrb[0].mxu0
  %172 = vmatprep.mubr.f32.mxu0 %v67
  %173 = vmatmul.mubr.f32.gmra.mrb[0].mxu0 %v25
  %v174 = vpop.f32.mrb[0].mxu0
  %v175 = vadd.f32 0.0, %v174
  %v176 = vpop.f32.mrb[0].mxu0
  %177 = vdwg.mxu0
  %v178 = vmax.f32 %v140, %v145
  %v179 = vmax.f32 %v178, %v150
  %v180 = vmax.f32 %v179, %v155
  %v181 = vmax.f32 %v160, %v165
  %v182 = vmax.f32 %v181, %v170
  %v183 = vmax.f32 %v182, %v175
  %v184 = vmax.f32 %v180, 0.0
  %v185 = vmax.f32 %v183, 0.0
  %186 = vst [vmem:[%s2] sm:$0xff] %v184
  %187 = vst [vmem:[%s2 + $0x8] sm:$0xff] %v185
  // Predicated region
  $region10: #{cnn_block2_forward.5} parent=0 // pred_check
    _
  $region11: #{cnn_block2_forward.5} parent=0 // pred_check_branch
    %189 = sbr.rel (0) target = $region13
  $region12: #{cnn_block2_forward.5} parent=0 // pred_region
    _
  $region13: #{cnn_block2_forward.5} parent=0 // pred_fallthru
    _
  // Predicated region
  $region14: #{cnn_block2_forward.5} parent=0 // pred_check
    _
  $region15: #{cnn_block2_forward.5} parent=0 // pred_check_branch
    %191 = sbr.rel (0) target = $region17
  $region16: #{cnn_block2_forward.5} parent=0 // pred_region
    _
  $region17: #{cnn_block2_forward.5} parent=0 // pred_fallthru
    _

// kernel: cnn_block2_forward.4
$region0: #{cnn_block2_forward.4}
  #allocation0 [shape = 'u32[]', space=smem, size = 0x4, offset = 0x4, fixed_abs, tag = 'smem constant byte address 0x4 - core index']
  #allocation1 [shape = 'u32[144,128]{1,0:T(1,128)}', space=vmem, size = 0x12000, scoped, tag = 'internal scratch']
  %s0 = inlined_call_operand.vmem [shape: f32[129,128], index: 0, kind: input, shape index: {}]
  %s1 = inlined_call_operand.vmem [shape: f32[32,129], index: 1, kind: input, shape index: {}]
  %s2 = inlined_call_operand.vmem [shape: f32[8,128], index: 2, kind: output, shape index: {}]
  %s3 = sld [smem:[#allocation0]]
  $region18: #{cnn_block2_forward.4} parent=0
    _
  %s5 = ssub.s32 1, %s3
  %s6 = scalar_select 0, %s5, %s3
  // Predicated region
  $region2: #{cnn_block2_forward.4} parent=0 // pred_check
    _
  $region3: #{cnn_block2_forward.4} parent=0 // pred_check_branch
    %8 = sbr.rel (0) target = $region5
  $region4: #{cnn_block2_forward.4} parent=0 // pred_region
    _
  $region5: #{cnn_block2_forward.4} parent=0 // pred_fallthru
    _
  // Predicated region
  $region6: #{cnn_block2_forward.4} parent=0 // pred_check
    _
  $region7: #{cnn_block2_forward.4} parent=0 // pred_check_branch
    %10 = sbr.rel (0) target = $region9
  $region8: #{cnn_block2_forward.4} parent=0 // pred_region
    _
  $region9: #{cnn_block2_forward.4} parent=0 // pred_fallthru
    _
  %v11 = vld [vmem:[%s1] sm:$0xff]
  %v12 = vld [vmem:[%s1 + $0x8] sm:$0xff]
  %v13 = vld [vmem:[%s1 + $0x10] sm:$0xff]
  %v14 = vld [vmem:[%s1 + $0x18] sm:$0xff]
  %v15 = vld [vmem:[%s1 + $0x20] sm:$0xff]
  %v16 = vld [vmem:[%s1 + $0x28] sm:$0xff]
  %v17 = vld [vmem:[%s1 + $0x30] sm:$0xff]
  %v18 = vld [vmem:[%s1 + $0x38] sm:$0xff]
  %v19 = vld [vmem:[%s0] sm:$0xff]
  %v20 = vld [vmem:[%s0 + $0x8] sm:$0xff]
  %v21 = vld [vmem:[%s0 + $0x10] sm:$0xff]
  %v22 = vld [vmem:[%s0 + $0x18] sm:$0xff]
  %v23 = vld [vmem:[%s0 + $0x20] sm:$0xff]
  %v24 = vld [vmem:[%s0 + $0x28] sm:$0xff]
  %v25 = vld [vmem:[%s0 + $0x30] sm:$0xff]
  %v26 = vld [vmem:[%s0 + $0x38] sm:$0xff]
  %v27 = vld [vmem:[%s0 + $0x40] sm:$0xff]
  %v28 = vld [vmem:[%s0 + $0x48] sm:$0xff]
  %v29 = vld [vmem:[%s0 + $0x50] sm:$0xff]
  %v30 = vld [vmem:[%s0 + $0x58] sm:$0xff]
  %v31 = vld [vmem:[%s0 + $0x60] sm:$0xff]
  %v32 = vld [vmem:[%s0 + $0x68] sm:$0xff]
  %v33 = vld [vmem:[%s0 + $0x70] sm:$0xff]
  %v34 = vld [vmem:[%s0 + $0x78] sm:$0xff]
  %v35 = vld [vmem:[%s0 + $0x80] sm:$0x1]
  %vm36 = vcmask 7168
  %v38 = vsel %vm36, %v12, 0
  %v41 = vsel %vm36, %v14, 0
  %v44 = vsel %vm36, %v16, 0
  %v47 = vsel %vm36, %v18, 0
  %vm49 = vcmask 1040384
  %v51 = vsel %vm49, %v35, 0
  %53 = vmatprep.subr.mxu0 0.0
  %54 = vmatpush1.msra.mxu0 %v19
  %55 = vmatprep.subr.mxu0 0.0
  %56 = vmatpush1.msra.mxu0 %v20
  %57 = vmatprep.subr.mxu0 0.0
  %58 = vmatpush1.msra.mxu0 %v21
  %59 = vmatprep.subr.mxu0 0.0
  %60 = vmatpush1.msra.mxu0 %v22
  %61 = vmatprep.subr.mxu0 0.0
  %62 = vmatpush1.msra.mxu0 %v23
  %63 = vmatprep.subr.mxu0 0.0
  %64 = vmatpush1.msra.mxu0 %v24
  %65 = vmatprep.subr.mxu0 0.0
  %66 = vmatpush1.msra.mxu0 %v25
  %67 = vmatprep.subr.mxu0 0.0
  %68 = vmatpush1.msra.mxu0 %v26
  %69 = vmatprep.subr.mxu0 0.0
  %70 = vmatpush1.msra.mxu0 %v27
  %71 = vmatprep.subr.mxu0 0.0
  %72 = vmatpush1.msra.mxu0 %v28
  %73 = vmatprep.subr.mxu0 0.0
  %74 = vmatpush1.msra.mxu0 %v29
  %75 = vmatprep.subr.mxu0 0.0
  %76 = vmatpush1.msra.mxu0 %v30
  %77 = vmatprep.subr.mxu0 0.0
  %78 = vmatpush1.msra.mxu0 %v31
  %79 = vmatprep.subr.mxu0 0.0
  %80 = vmatpush1.msra.mxu0 %v32
  %81 = vmatprep.subr.mxu0 0.0
  %82 = vmatpush1.msra.mxu0 %v33
  %83 = vmatprep.subr.mxu0 0.0
  %84 = vmatpush1.msra.mxu0 %v34
  %85 = vmatprep.subr.mxu0 0.0
  %86 = vmatpush1.msra.mxu0 %v51
  %87 = vmatprep.subr.mxu0 0.0
  %88 = vmatpush1.msra.mxu0 0.0
  %89 = vmatprep.subr.mxu0 0.0
  %90 = vmatpush1.msra.mxu0 0.0
  %91 = vmatprep.subr.mxu0 0.0
  %92 = vmatpush1.msra.mxu0 0.0
  %93 = vmatprep.subr.mxu0 0.0
  %94 = vmatpush1.msra.mxu0 0.0
  %95 = vmatprep.subr.mxu0 0.0
  %96 = vmatpush1.msra.mxu0 0.0
  %97 = vmatprep.subr.mxu0 0.0
  %98 = vmatpush1.msra.mxu0 0.0
  %99 = vmatprep.subr.mxu0 0.0
  %100 = vmatpush1.msra.mxu0 0.0
  %101 = vmatprep.subr.mxu0 0.0
  %102 = vmatpush1.msra.mxu0 0.0
  %103 = vmatprep.subr.mxu0 0.0
  %104 = vmatpush1.msra.mxu0 0.0
  %105 = vmatprep.subr.mxu0 0.0
  %106 = vmatpush1.msra.mxu0 0.0
  %107 = vmatprep.subr.mxu0 0.0
  %108 = vmatpush1.msra.mxu0 0.0
  %109 = vmatprep.subr.mxu0 0.0
  %110 = vmatpush1.msra.mxu0 0.0
  %111 = vmatprep.subr.mxu0 0.0
  %112 = vmatpush1.msra.mxu0 0.0
  %113 = vmatprep.subr.mxu0 0.0
  %114 = vmatpush1.msra.mxu0 0.0
  %115 = vmatprep.subr.mxu0 0.0
  %116 = vmatpush1.msra.mxu0 0.0
  %117 = vmatprep.mubr.f32.mxu0 %v38
  %118 = vmatmul.mubr.f32.gmra.mrb[0].mxu0 %v11
  %v119 = vpop.f32.mrb[0].mxu0
  %v120 = vadd.f32 0.0, %v119
  %v121 = vpop.f32.mrb[0].mxu0
  %122 = vmatprep.mubr.f32.mxu0 %v41
  %123 = vmatmul.mubr.f32.gmra.mrb[0].mxu0 %v13
  %v124 = vpop.f32.mrb[0].mxu0
  %v125 = vadd.f32 0.0, %v124
  %v126 = vpop.f32.mrb[0].mxu0
  %127 = vmatprep.mubr.f32.mxu0 %v44
  %128 = vmatmul.mubr.f32.gmra.mrb[0].mxu0 %v15
  %v129 = vpop.f32.mrb[0].mxu0
  %v130 = vadd.f32 0.0, %v129
  %v131 = vpop.f32.mrb[0].mxu0
  %132 = vmatprep.mubr.f32.mxu0 %v47
  %133 = vmatmul.mubr.f32.gmra.mrb[0].mxu0 %v17
  %v134 = vpop.f32.mrb[0].mxu0
  %v135 = vadd.f32 0.0, %v134
  %v136 = vpop.f32.mrb[0].mxu0
  %137 = vdwg.mxu0
  %v138 = vmax.f32 %v120, %v125
  %v139 = vmax.f32 %v138, %v130
  %v140 = vmax.f32 %v139, %v135
  %v141 = vmax.f32 %v140, 0.0
  %142 = vst [vmem:[%s2] sm:$0xff] %v141
  // Predicated region
  $region10: #{cnn_block2_forward.4} parent=0 // pred_check
    _
  $region11: #{cnn_block2_forward.4} parent=0 // pred_check_branch
    %144 = sbr.rel (0) target = $region13
  $region12: #{cnn_block2_forward.4} parent=0 // pred_region
    _
  $region13: #{cnn_block2_forward.4} parent=0 // pred_fallthru
    _
  // Predicated region
  $region14: #{cnn_block2_forward.4} parent=0 // pred_check
    _
  $region15: #{cnn_block2_forward.4} parent=0 // pred_check_branch
    %146 = sbr.rel (0) target = $region17
  $region16: #{cnn_block2_forward.4} parent=0 // pred_region
    _
  $region17: #{cnn_block2_forward.4} parent=0 // pred_fallthru
    _

// kernel: cnn_block2_forward.3
$region0: #{cnn_block2_forward.3}
  #allocation0 [shape = 'u32[]', space=smem, size = 0x4, offset = 0x4, fixed_abs, tag = 'smem constant byte address 0x4 - core index']
  #allocation1 [shape = 'u32[144,128]{1,0:T(1,128)}', space=vmem, size = 0x12000, scoped, tag = 'internal scratch']
  %s0 = inlined_call_operand.vmem [shape: f32[97,128], index: 0, kind: input, shape index: {}]
  %s1 = inlined_call_operand.vmem [shape: f32[32,97], index: 1, kind: input, shape index: {}]
  %s2 = inlined_call_operand.vmem [shape: f32[8,128], index: 2, kind: output, shape index: {}]
  %s3 = sld [smem:[#allocation0]]
  $region18: #{cnn_block2_forward.3} parent=0
    _
  %s5 = ssub.s32 1, %s3
  %s6 = scalar_select 0, %s5, %s3
  // Predicated region
  $region2: #{cnn_block2_forward.3} parent=0 // pred_check
    _
  $region3: #{cnn_block2_forward.3} parent=0 // pred_check_branch
    %8 = sbr.rel (0) target = $region5
  $region4: #{cnn_block2_forward.3} parent=0 // pred_region
    _
  $region5: #{cnn_block2_forward.3} parent=0 // pred_fallthru
    _
  // Predicated region
  $region6: #{cnn_block2_forward.3} parent=0 // pred_check
    _
  $region7: #{cnn_block2_forward.3} parent=0 // pred_check_branch
    %10 = sbr.rel (0) target = $region9
  $region8: #{cnn_block2_forward.3} parent=0 // pred_region
    _
  $region9: #{cnn_block2_forward.3} parent=0 // pred_fallthru
    _
  %v11 = vld [vmem:[%s1] sm:$0xff]
  %v12 = vld [vmem:[%s1 + $0x8] sm:$0xff]
  %v13 = vld [vmem:[%s1 + $0x10] sm:$0xff]
  %v14 = vld [vmem:[%s1 + $0x18] sm:$0xff]
  %v15 = vld [vmem:[%s0] sm:$0xff]
  %v16 = vld [vmem:[%s0 + $0x8] sm:$0xff]
  %v17 = vld [vmem:[%s0 + $0x10] sm:$0xff]
  %v18 = vld [vmem:[%s0 + $0x18] sm:$0xff]
  %v19 = vld [vmem:[%s0 + $0x20] sm:$0xff]
  %v20 = vld [vmem:[%s0 + $0x28] sm:$0xff]
  %v21 = vld [vmem:[%s0 + $0x30] sm:$0xff]
  %v22 = vld [vmem:[%s0 + $0x38] sm:$0xff]
  %v23 = vld [vmem:[%s0 + $0x40] sm:$0xff]
  %v24 = vld [vmem:[%s0 + $0x48] sm:$0xff]
  %v25 = vld [vmem:[%s0 + $0x50] sm:$0xff]
  %v26 = vld [vmem:[%s0 + $0x58] sm:$0xff]
  %v27 = vld [vmem:[%s0 + $0x60] sm:$0x1]
  %vm28 = vcmask 793600
  %v30 = vsel %vm28, %v11, 0
  %v33 = vsel %vm28, %v12, 0
  %v36 = vsel %vm28, %v13, 0
  %v39 = vsel %vm28, %v14, 0
  %vm41 = vcmask 1040384
  %v43 = vsel %vm41, %v27, 0
  %45 = vmatprep.subr.mxu0 0.0
  %46 = vmatpush1.msra.mxu0 %v15
  %47 = vmatprep.subr.mxu0 0.0
  %48 = vmatpush1.msra.mxu0 %v16
  %49 = vmatprep.subr.mxu0 0.0
  %50 = vmatpush1.msra.mxu0 %v17
  %51 = vmatprep.subr.mxu0 0.0
  %52 = vmatpush1.msra.mxu0 %v18
  %53 = vmatprep.subr.mxu0 0.0
  %54 = vmatpush1.msra.mxu0 %v19
  %55 = vmatprep.subr.mxu0 0.0
  %56 = vmatpush1.msra.mxu0 %v20
  %57 = vmatprep.subr.mxu0 0.0
  %58 = vmatpush1.msra.mxu0 %v21
  %59 = vmatprep.subr.mxu0 0.0
  %60 = vmatpush1.msra.mxu0 %v22
  %61 = vmatprep.subr.mxu0 0.0
  %62 = vmatpush1.msra.mxu0 %v23
  %63 = vmatprep.subr.mxu0 0.0
  %64 = vmatpush1.msra.mxu0 %v24
  %65 = vmatprep.subr.mxu0 0.0
  %66 = vmatpush1.msra.mxu0 %v25
  %67 = vmatprep.subr.mxu0 0.0
  %68 = vmatpush1.msra.mxu0 %v26
  %69 = vmatprep.subr.mxu0 0.0
  %70 = vmatpush1.msra.mxu0 %v43
  %71 = vmatprep.subr.mxu0 0.0
  %72 = vmatpush1.msra.mxu0 0.0
  %73 = vmatprep.subr.mxu0 0.0
  %74 = vmatpush1.msra.mxu0 0.0
  %75 = vmatprep.subr.mxu0 0.0
  %76 = vmatpush1.msra.mxu0 0.0
  %77 = vmatprep.subr.mxu0 0.0
  %78 = vmatpush1.msra.mxu0 0.0
  %79 = vmatprep.subr.mxu0 0.0
  %80 = vmatpush1.msra.mxu0 0.0
  %81 = vmatprep.subr.mxu0 0.0
  %82 = vmatpush1.msra.mxu0 0.0
  %83 = vmatprep.subr.mxu0 0.0
  %84 = vmatpush1.msra.mxu0 0.0
  %85 = vmatprep.subr.mxu0 0.0
  %86 = vmatpush1.msra.mxu0 0.0
  %87 = vmatprep.subr.mxu0 0.0
  %88 = vmatpush1.msra.mxu0 0.0
  %89 = vmatprep.subr.mxu0 0.0
  %90 = vmatpush1.msra.mxu0 0.0
  %91 = vmatprep.subr.mxu0 0.0
  %92 = vmatpush1.msra.mxu0 0.0
  %93 = vmatprep.subr.mxu0 0.0
  %94 = vmatpush1.msra.mxu0 0.0
  %95 = vmatprep.subr.mxu0 0.0
  %96 = vmatpush1.msra.mxu0 0.0
  %97 = vmatprep.subr.mxu0 0.0
  %98 = vmatpush1.msra.mxu0 0.0
  %99 = vmatprep.subr.mxu0 0.0
  %100 = vmatpush1.msra.mxu0 0.0
  %101 = vmatprep.subr.mxu0 0.0
  %102 = vmatpush1.msra.mxu0 0.0
  %103 = vmatprep.subr.mxu0 0.0
  %104 = vmatpush1.msra.mxu0 0.0
  %105 = vmatprep.subr.mxu0 0.0
  %106 = vmatpush1.msra.mxu0 0.0
  %107 = vmatprep.subr.mxu0 0.0
  %108 = vmatpush1.msra.mxu0 0.0
  %109 = vmatprep.mubr.f32.mxu0 0.0
  %110 = vmatmul.mubr.f32.gmra.mrb[0].mxu0 %v30
  %v111 = vpop.f32.mrb[0].mxu0
  %v112 = vadd.f32 0.0, %v111
  %v113 = vpop.f32.mrb[0].mxu0
  %114 = vmatprep.mubr.f32.mxu0 0.0
  %115 = vmatmul.mubr.f32.gmra.mrb[0].mxu0 %v33
  %v116 = vpop.f32.mrb[0].mxu0
  %v117 = vadd.f32 0.0, %v116
  %v118 = vpop.f32.mrb[0].mxu0
  %119 = vmatprep.mubr.f32.mxu0 0.0
  %120 = vmatmul.mubr.f32.gmra.mrb[0].mxu0 %v36
  %v121 = vpop.f32.mrb[0].mxu0
  %v122 = vadd.f32 0.0, %v121
  %v123 = vpop.f32.mrb[0].mxu0
  %124 = vmatprep.mubr.f32.mxu0 0.0
  %125 = vmatmul.mubr.f32.gmra.mrb[0].mxu0 %v39
  %v126 = vpop.f32.mrb[0].mxu0
  %v127 = vadd.f32 0.0, %v126
  %v128 = vpop.f32.mrb[0].mxu0
  %129 = vdwg.mxu0
  %v130 = vmax.f32 %v112, %v117
  %v131 = vmax.f32 %v130, %v122
  %v132 = vmax.f32 %v131, %v127
  %v133 = vmax.f32 %v132, 0.0
  %134 = vst [vmem:[%s2] sm:$0xff] %v133
  // Predicated region
  $region10: #{cnn_block2_forward.3} parent=0 // pred_check
    _
  $region11: #{cnn_block2_forward.3} parent=0 // pred_check_branch
    %136 = sbr.rel (0) target = $region13
  $region12: #{cnn_block2_forward.3} parent=0 // pred_region
    _
  $region13: #{cnn_block2_forward.3} parent=0 // pred_fallthru
    _
  // Predicated region
  $region14: #{cnn_block2_forward.3} parent=0 // pred_check
    _
  $region15: #{cnn_block2_forward.3} parent=0 // pred_check_branch
    %138 = sbr.rel (0) target = $region17
  $region16: #{cnn_block2_forward.3} parent=0 // pred_region
    _
  $region17: #{cnn_block2_forward.3} parent=0 // pred_fallthru
    _

</llo_original>
